<compile_context>
chip_gen: v5e
topology: v5e:2x2
jax: 0.10.0
libtpu: 0.0.40
codegen_flags: <defaults>
</compile_context>

<pallas_src>
import jax
import jax.numpy as jnp
import numpy as np
from jax.experimental import pallas as pl
from jax.experimental.pallas import tpu as pltpu


def _make_lstm_fc_kernel(B, Tm1):
    """Build the kernel with static batch / step counts baked in."""

    def kernel(x_ref, wih_ref, whh_ref, b_ref, fcw_ref, fcb_ref,
               hseq_ref, fc_ref):
        """Single-layer LSTM recurrence with hoisted input / output matmuls.

        x_ref   : ((T-1)*B, E)  time-major flattened embeddings
        wih_ref : (E, 4H)       whh_ref : (H, 4H)       b_ref : (1, 4H)
        fcw_ref : (H, Vp)       fcb_ref : (1, Vp)       (Vp = V padded to 128)
        hseq_ref: ((T-1)*B, H)  time-major hidden states
        fc_ref  : ((T-1)*B, Vp) time-major FC head outputs (lane-dense)
        """
        H = whh_ref.shape[0]
        whh = whh_ref[...]

        # (1) Hoisted input projection + single bias broadcast: one MXU matmul
        #     covering every timestep (no recurrent dependency).
        xproj = (jnp.dot(x_ref[...], wih_ref[...],
                         preferred_element_type=jnp.float32)
                 + b_ref[...])                                  # ((T-1)*B, 4H)

        h = jnp.zeros((B, H), jnp.float32)
        c = jnp.zeros((B, H), jnp.float32)
        hs = []

        # Serial recurrence: only the h @ whh matmul + gate math per step.
        # T is small and static, so a Python unroll is fine here.
        for t in range(Tm1):
            gates = (xproj[t * B:(t + 1) * B, :]
                     + jnp.dot(h, whh, preferred_element_type=jnp.float32))
            # 4H == 128: activate the whole gate vreg in one EUP pass; tanh is
            # applied to the RAW g slice (not the sigmoid output).
            sig = jax.nn.sigmoid(gates)                          # (B, 4H)
            g = jnp.tanh(gates[:, 2 * H:3 * H])                  # (B, H)
            c = sig[:, H:2 * H] * c + sig[:, 0:H] * g
            h = sig[:, 3 * H:4 * H] * jnp.tanh(c)
            hs.append(h)

        # (2) Stack hidden states once (time-major) and write with one store.
        hs_all = jnp.concatenate(hs, axis=0)                     # ((T-1)*B, H)
        hseq_ref[...] = hs_all

        # (3) Batched FC head after the loop; weights pre-padded to 128 output
        #     lanes so this store is fully lane-dense.
        fc_ref[...] = (jnp.dot(hs_all, fcw_ref[...],
                               preferred_element_type=jnp.float32)
                       + fcb_ref[...])

    return kernel


def embed_forward(sentence, lengths, params):
    """Pallas-backed equivalent of Embed.forward(sentence, lengths)."""
    del lengths  # the PyTorch forward never uses `lengths`
    emb_table, w_ih, w_hh, b_ih, b_hh, fc_w, fc_b = params
    B, T = sentence.shape
    E = emb_table.shape[1]
    H = w_hh.shape[1]
    V = fc_w.shape[0]
    Vp = 128 * pl.cdiv(V, 128)      # pad FC output lanes to a multiple of 128

    # ---- layout glue (plain JAX, not the hot path) ----
    embeds = emb_table[sentence].astype(jnp.float32)             # (B, T, E)
    # Time-major, flattened: row t*B + b  →  contiguous per-step slices.
    x_tm = jnp.transpose(embeds[:, :T - 1, :], (1, 0, 2)).reshape((T - 1) * B, E)
    wih_t = jnp.transpose(w_ih)                                  # (E, 4H)
    whh_t = jnp.transpose(w_hh)                                  # (H, 4H)
    bias = (b_ih + b_hh).reshape(1, 4 * H)
    fcw_p = jnp.zeros((H, Vp), jnp.float32).at[:, :V].set(jnp.transpose(fc_w))
    fcb_p = jnp.zeros((1, Vp), jnp.float32).at[:, :V].set(fc_b)

    hseq_tm, fc_tm = pl.pallas_call(
        _make_lstm_fc_kernel(B, T - 1),
        out_shape=(
            jax.ShapeDtypeStruct(((T - 1) * B, H), jnp.float32),
            jax.ShapeDtypeStruct(((T - 1) * B, Vp), jnp.float32),
        ),
        in_specs=[pl.BlockSpec(memory_space=pltpu.MemorySpace.VMEM)] * 6,
        out_specs=(pl.BlockSpec(memory_space=pltpu.MemorySpace.VMEM),) * 2,
    )(x_tm, wih_t, whh_t, bias, fcw_p, fcb_p)

    # ---- un-pack / permute to the PyTorch output layout ----
    hseq_tbh = hseq_tm.reshape(T - 1, B, H)                      # (T-1, B, H)
    word_embed = jnp.transpose(hseq_tbh, (1, 0, 2))              # (B, T-1, H)
    h_final = hseq_tbh[-1]                                       # (B, H)
    fc_tbv = fc_tm[:, :V].reshape(T - 1, B, V)                   # (T-1, B, V)
    fc_out = jnp.transpose(fc_tbv, (1, 2, 0))                    # (B, V, T-1)
    return fc_out, word_embed, h_final


def embed_forward_ref(sentence, params):
    """Pure-JAX reference (mirrors the PyTorch loop) for validation."""
    emb_table, w_ih, w_hh, b_ih, b_hh, fc_w, fc_b = params
    B, T = sentence.shape
    H = w_hh.shape[1]
    embeds = emb_table[sentence].astype(jnp.float32)
    h = jnp.zeros((B, H), jnp.float32)
    c = jnp.zeros((B, H), jnp.float32)
    outs, hs = [], []
    for t in range(T - 1):
        x = embeds[:, t, :]
        gates = x @ w_ih.T + h @ w_hh.T + b_ih + b_hh
        i_g = jax.nn.sigmoid(gates[:, 0 * H:1 * H])
        f_g = jax.nn.sigmoid(gates[:, 1 * H:2 * H])
        g_g = jnp.tanh(gates[:, 2 * H:3 * H])
        o_g = jax.nn.sigmoid(gates[:, 3 * H:4 * H])
        c = f_g * c + i_g * g_g
        h = o_g * jnp.tanh(c)
        hs.append(h)
        outs.append(h @ fc_w.T + fc_b)
    fc_out = jnp.transpose(jnp.stack(outs, axis=1), (0, 2, 1))
    return fc_out, jnp.stack(hs, axis=1), h


if __name__ == "__main__":
    # Small shapes consistent with the module: batch=2, seq=8, embed=16,
    # hidden=32, vocab.idx=24.
    B, T, E, H, V = 2, 8, 16, 32, 24

    key = jax.random.PRNGKey(0)
    ks = jax.random.split(key, 8)
    s = 1.0 / np.sqrt(H)
    emb_table = jax.random.normal(ks[0], (V, E), jnp.float32) * 0.1
    w_ih = jax.random.uniform(ks[1], (4 * H, E), jnp.float32, -s, s)
    w_hh = jax.random.uniform(ks[2], (4 * H, H), jnp.float32, -s, s)
    b_ih = jax.random.uniform(ks[3], (4 * H,), jnp.float32, -s, s)
    b_hh = jax.random.uniform(ks[4], (4 * H,), jnp.float32, -s, s)
    fc_w = jax.random.uniform(ks[5], (V, H), jnp.float32, -s, s)
    fc_b = jax.random.uniform(ks[6], (V,), jnp.float32, -s, s)
    params = (emb_table, w_ih, w_hh, b_ih, b_hh, fc_w, fc_b)

    sentence = jax.random.randint(ks[7], (B, T), 0, V, dtype=jnp.int32)
    lengths = jnp.full((B,), T, dtype=jnp.int32)  # unused, kept for parity

    fc_out, word_embed, h_final = jax.block_until_ready(
        embed_forward(sentence, lengths, params))

    # Validate against the pure-JAX reference.
    fc_ref, we_ref, hf_ref = embed_forward_ref(sentence, params)
    assert fc_out.shape == (B, V, T - 1)
    assert word_embed.shape == (B, T - 1, H)
    assert h_final.shape == (B, H)
    np.testing.assert_allclose(np.asarray(fc_out), np.asarray(fc_ref),
                               rtol=1e-5, atol=1e-5)
    np.testing.assert_allclose(np.asarray(word_embed), np.asarray(we_ref),
                               rtol=1e-5, atol=1e-5)
    np.testing.assert_allclose(np.asarray(h_final), np.asarray(hf_ref),
                               rtol=1e-5, atol=1e-5)

    print("KERNEL_OK")
</pallas_src>

<mosaic_0001>
module attributes {stable_mosaic.version = 11 : i64} {
  func.func @kernel(%arg0: memref<14x16xf32, #tpu.memory_space<vmem>>, %arg1: memref<16x128xf32, #tpu.memory_space<vmem>>, %arg2: memref<32x128xf32, #tpu.memory_space<vmem>>, %arg3: memref<1x128xf32, #tpu.memory_space<vmem>>, %arg4: memref<32x128xf32, #tpu.memory_space<vmem>>, %arg5: memref<1x128xf32, #tpu.memory_space<vmem>>, %arg6: memref<14x32xf32, #tpu.memory_space<vmem>>, %arg7: memref<14x128xf32, #tpu.memory_space<vmem>>) attributes {dimension_semantics = [], scalar_prefetch = 0 : i64, scratch_operands = 0 : i64, tpu.core_type = #tpu.core_type<tc>} {
    %c0 = arith.constant 0 : index
    %c0_0 = arith.constant 0 : index
    %0 = vector.load %arg2[%c0, %c0_0] : memref<32x128xf32, #tpu.memory_space<vmem>>, vector<32x128xf32>
    %c0_1 = arith.constant 0 : index
    %c0_2 = arith.constant 0 : index
    %1 = vector.load %arg0[%c0_1, %c0_2] : memref<14x16xf32, #tpu.memory_space<vmem>>, vector<14x16xf32>
    %c0_3 = arith.constant 0 : index
    %c0_4 = arith.constant 0 : index
    %2 = vector.load %arg1[%c0_3, %c0_4] : memref<16x128xf32, #tpu.memory_space<vmem>>, vector<16x128xf32>
    %cst = arith.constant dense<0.000000e+00> : vector<14x128xf32>
    %3 = tpu.matmul %1, %2, %cst {dimension_numbers = #tpu.dot_dimension_numbers<[1], [0], [0], [1], [0, 0, 1, 1], [], []>} : vector<14x16xf32>, vector<16x128xf32>, vector<14x128xf32> -> vector<14x128xf32>
    %c0_5 = arith.constant 0 : index
    %c0_6 = arith.constant 0 : index
    %4 = vector.load %arg3[%c0_5, %c0_6] : memref<1x128xf32, #tpu.memory_space<vmem>>, vector<1x128xf32>
    %5 = vector.broadcast %4 : vector<1x128xf32> to vector<14x128xf32>
    %6 = arith.addf %3, %5 : vector<14x128xf32>
    %cst_7 = arith.constant 0.000000e+00 : f32
    %7 = vector.broadcast %cst_7 : f32 to vector<2x32xf32>
    %cst_8 = arith.constant 0.000000e+00 : f32
    %8 = vector.broadcast %cst_8 : f32 to vector<2x32xf32>
    %9 = vector.extract_strided_slice %6 {offsets = [0, 0], sizes = [2, 128], strides = [1, 1]} : vector<14x128xf32> to vector<2x128xf32>
    %cst_9 = arith.constant dense<0.000000e+00> : vector<2x128xf32>
    %10 = tpu.matmul %7, %0, %cst_9 {dimension_numbers = #tpu.dot_dimension_numbers<[1], [0], [0], [1], [0, 0, 1, 1], [], []>} : vector<2x32xf32>, vector<32x128xf32>, vector<2x128xf32> -> vector<2x128xf32>
    %11 = arith.addf %9, %10 : vector<2x128xf32>
    %12 = arith.negf %11 : vector<2x128xf32>
    %13 = math.exp %12 : vector<2x128xf32>
    %cst_10 = arith.constant 1.000000e+00 : f32
    %14 = vector.broadcast %cst_10 : f32 to vector<2x128xf32>
    %15 = arith.addf %14, %13 : vector<2x128xf32>
    %16 = arith.divf %14, %15 : vector<2x128xf32>
    %17 = vector.extract_strided_slice %11 {offsets = [0, 64], sizes = [2, 32], strides = [1, 1]} : vector<2x128xf32> to vector<2x32xf32>
    %18 = math.tanh %17 : vector<2x32xf32>
    %19 = vector.extract_strided_slice %16 {offsets = [0, 32], sizes = [2, 32], strides = [1, 1]} : vector<2x128xf32> to vector<2x32xf32>
    %20 = arith.mulf %19, %8 : vector<2x32xf32>
    %21 = vector.extract_strided_slice %16 {offsets = [0, 0], sizes = [2, 32], strides = [1, 1]} : vector<2x128xf32> to vector<2x32xf32>
    %22 = arith.mulf %21, %18 : vector<2x32xf32>
    %23 = arith.addf %20, %22 : vector<2x32xf32>
    %24 = vector.extract_strided_slice %16 {offsets = [0, 96], sizes = [2, 32], strides = [1, 1]} : vector<2x128xf32> to vector<2x32xf32>
    %25 = math.tanh %23 : vector<2x32xf32>
    %26 = arith.mulf %24, %25 : vector<2x32xf32>
    %27 = vector.extract_strided_slice %6 {offsets = [2, 0], sizes = [2, 128], strides = [1, 1]} : vector<14x128xf32> to vector<2x128xf32>
    %cst_11 = arith.constant dense<0.000000e+00> : vector<2x128xf32>
    %28 = tpu.matmul %26, %0, %cst_11 {dimension_numbers = #tpu.dot_dimension_numbers<[1], [0], [0], [1], [0, 0, 1, 1], [], []>} : vector<2x32xf32>, vector<32x128xf32>, vector<2x128xf32> -> vector<2x128xf32>
    %29 = arith.addf %27, %28 : vector<2x128xf32>
    %30 = arith.negf %29 : vector<2x128xf32>
    %31 = math.exp %30 : vector<2x128xf32>
    %cst_12 = arith.constant 1.000000e+00 : f32
    %32 = vector.broadcast %cst_12 : f32 to vector<2x128xf32>
    %33 = arith.addf %32, %31 : vector<2x128xf32>
    %34 = arith.divf %32, %33 : vector<2x128xf32>
    %35 = vector.extract_strided_slice %29 {offsets = [0, 64], sizes = [2, 32], strides = [1, 1]} : vector<2x128xf32> to vector<2x32xf32>
    %36 = math.tanh %35 : vector<2x32xf32>
    %37 = vector.extract_strided_slice %34 {offsets = [0, 32], sizes = [2, 32], strides = [1, 1]} : vector<2x128xf32> to vector<2x32xf32>
    %38 = arith.mulf %37, %23 : vector<2x32xf32>
    %39 = vector.extract_strided_slice %34 {offsets = [0, 0], sizes = [2, 32], strides = [1, 1]} : vector<2x128xf32> to vector<2x32xf32>
    %40 = arith.mulf %39, %36 : vector<2x32xf32>
    %41 = arith.addf %38, %40 : vector<2x32xf32>
    %42 = vector.extract_strided_slice %34 {offsets = [0, 96], sizes = [2, 32], strides = [1, 1]} : vector<2x128xf32> to vector<2x32xf32>
    %43 = math.tanh %41 : vector<2x32xf32>
    %44 = arith.mulf %42, %43 : vector<2x32xf32>
    %45 = vector.extract_strided_slice %6 {offsets = [4, 0], sizes = [2, 128], strides = [1, 1]} : vector<14x128xf32> to vector<2x128xf32>
    %cst_13 = arith.constant dense<0.000000e+00> : vector<2x128xf32>
    %46 = tpu.matmul %44, %0, %cst_13 {dimension_numbers = #tpu.dot_dimension_numbers<[1], [0], [0], [1], [0, 0, 1, 1], [], []>} : vector<2x32xf32>, vector<32x128xf32>, vector<2x128xf32> -> vector<2x128xf32>
    %47 = arith.addf %45, %46 : vector<2x128xf32>
    %48 = arith.negf %47 : vector<2x128xf32>
    %49 = math.exp %48 : vector<2x128xf32>
    %cst_14 = arith.constant 1.000000e+00 : f32
    %50 = vector.broadcast %cst_14 : f32 to vector<2x128xf32>
    %51 = arith.addf %50, %49 : vector<2x128xf32>
    %52 = arith.divf %50, %51 : vector<2x128xf32>
    %53 = vector.extract_strided_slice %47 {offsets = [0, 64], sizes = [2, 32], strides = [1, 1]} : vector<2x128xf32> to vector<2x32xf32>
    %54 = math.tanh %53 : vector<2x32xf32>
    %55 = vector.extract_strided_slice %52 {offsets = [0, 32], sizes = [2, 32], strides = [1, 1]} : vector<2x128xf32> to vector<2x32xf32>
    %56 = arith.mulf %55, %41 : vector<2x32xf32>
    %57 = vector.extract_strided_slice %52 {offsets = [0, 0], sizes = [2, 32], strides = [1, 1]} : vector<2x128xf32> to vector<2x32xf32>
    %58 = arith.mulf %57, %54 : vector<2x32xf32>
    %59 = arith.addf %56, %58 : vector<2x32xf32>
    %60 = vector.extract_strided_slice %52 {offsets = [0, 96], sizes = [2, 32], strides = [1, 1]} : vector<2x128xf32> to vector<2x32xf32>
    %61 = math.tanh %59 : vector<2x32xf32>
    %62 = arith.mulf %60, %61 : vector<2x32xf32>
    %63 = vector.extract_strided_slice %6 {offsets = [6, 0], sizes = [2, 128], strides = [1, 1]} : vector<14x128xf32> to vector<2x128xf32>
    %cst_15 = arith.constant dense<0.000000e+00> : vector<2x128xf32>
    %64 = tpu.matmul %62, %0, %cst_15 {dimension_numbers = #tpu.dot_dimension_numbers<[1], [0], [0], [1], [0, 0, 1, 1], [], []>} : vector<2x32xf32>, vector<32x128xf32>, vector<2x128xf32> -> vector<2x128xf32>
    %65 = arith.addf %63, %64 : vector<2x128xf32>
    %66 = arith.negf %65 : vector<2x128xf32>
    %67 = math.exp %66 : vector<2x128xf32>
    %cst_16 = arith.constant 1.000000e+00 : f32
    %68 = vector.broadcast %cst_16 : f32 to vector<2x128xf32>
    %69 = arith.addf %68, %67 : vector<2x128xf32>
    %70 = arith.divf %68, %69 : vector<2x128xf32>
    %71 = vector.extract_strided_slice %65 {offsets = [0, 64], sizes = [2, 32], strides = [1, 1]} : vector<2x128xf32> to vector<2x32xf32>
    %72 = math.tanh %71 : vector<2x32xf32>
    %73 = vector.extract_strided_slice %70 {offsets = [0, 32], sizes = [2, 32], strides = [1, 1]} : vector<2x128xf32> to vector<2x32xf32>
    %74 = arith.mulf %73, %59 : vector<2x32xf32>
    %75 = vector.extract_strided_slice %70 {offsets = [0, 0], sizes = [2, 32], strides = [1, 1]} : vector<2x128xf32> to vector<2x32xf32>
    %76 = arith.mulf %75, %72 : vector<2x32xf32>
    %77 = arith.addf %74, %76 : vector<2x32xf32>
    %78 = vector.extract_strided_slice %70 {offsets = [0, 96], sizes = [2, 32], strides = [1, 1]} : vector<2x128xf32> to vector<2x32xf32>
    %79 = math.tanh %77 : vector<2x32xf32>
    %80 = arith.mulf %78, %79 : vector<2x32xf32>
    %81 = vector.extract_strided_slice %6 {offsets = [8, 0], sizes = [2, 128], strides = [1, 1]} : vector<14x128xf32> to vector<2x128xf32>
    %cst_17 = arith.constant dense<0.000000e+00> : vector<2x128xf32>
    %82 = tpu.matmul %80, %0, %cst_17 {dimension_numbers = #tpu.dot_dimension_numbers<[1], [0], [0], [1], [0, 0, 1, 1], [], []>} : vector<2x32xf32>, vector<32x128xf32>, vector<2x128xf32> -> vector<2x128xf32>
    %83 = arith.addf %81, %82 : vector<2x128xf32>
    %84 = arith.negf %83 : vector<2x128xf32>
    %85 = math.exp %84 : vector<2x128xf32>
    %cst_18 = arith.constant 1.000000e+00 : f32
    %86 = vector.broadcast %cst_18 : f32 to vector<2x128xf32>
    %87 = arith.addf %86, %85 : vector<2x128xf32>
    %88 = arith.divf %86, %87 : vector<2x128xf32>
    %89 = vector.extract_strided_slice %83 {offsets = [0, 64], sizes = [2, 32], strides = [1, 1]} : vector<2x128xf32> to vector<2x32xf32>
    %90 = math.tanh %89 : vector<2x32xf32>
    %91 = vector.extract_strided_slice %88 {offsets = [0, 32], sizes = [2, 32], strides = [1, 1]} : vector<2x128xf32> to vector<2x32xf32>
    %92 = arith.mulf %91, %77 : vector<2x32xf32>
    %93 = vector.extract_strided_slice %88 {offsets = [0, 0], sizes = [2, 32], strides = [1, 1]} : vector<2x128xf32> to vector<2x32xf32>
    %94 = arith.mulf %93, %90 : vector<2x32xf32>
    %95 = arith.addf %92, %94 : vector<2x32xf32>
    %96 = vector.extract_strided_slice %88 {offsets = [0, 96], sizes = [2, 32], strides = [1, 1]} : vector<2x128xf32> to vector<2x32xf32>
    %97 = math.tanh %95 : vector<2x32xf32>
    %98 = arith.mulf %96, %97 : vector<2x32xf32>
    %99 = vector.extract_strided_slice %6 {offsets = [10, 0], sizes = [2, 128], strides = [1, 1]} : vector<14x128xf32> to vector<2x128xf32>
    %cst_19 = arith.constant dense<0.000000e+00> : vector<2x128xf32>
    %100 = tpu.matmul %98, %0, %cst_19 {dimension_numbers = #tpu.dot_dimension_numbers<[1], [0], [0], [1], [0, 0, 1, 1], [], []>} : vector<2x32xf32>, vector<32x128xf32>, vector<2x128xf32> -> vector<2x128xf32>
    %101 = arith.addf %99, %100 : vector<2x128xf32>
    %102 = arith.negf %101 : vector<2x128xf32>
    %103 = math.exp %102 : vector<2x128xf32>
    %cst_20 = arith.constant 1.000000e+00 : f32
    %104 = vector.broadcast %cst_20 : f32 to vector<2x128xf32>
    %105 = arith.addf %104, %103 : vector<2x128xf32>
    %106 = arith.divf %104, %105 : vector<2x128xf32>
    %107 = vector.extract_strided_slice %101 {offsets = [0, 64], sizes = [2, 32], strides = [1, 1]} : vector<2x128xf32> to vector<2x32xf32>
    %108 = math.tanh %107 : vector<2x32xf32>
    %109 = vector.extract_strided_slice %106 {offsets = [0, 32], sizes = [2, 32], strides = [1, 1]} : vector<2x128xf32> to vector<2x32xf32>
    %110 = arith.mulf %109, %95 : vector<2x32xf32>
    %111 = vector.extract_strided_slice %106 {offsets = [0, 0], sizes = [2, 32], strides = [1, 1]} : vector<2x128xf32> to vector<2x32xf32>
    %112 = arith.mulf %111, %108 : vector<2x32xf32>
    %113 = arith.addf %110, %112 : vector<2x32xf32>
    %114 = vector.extract_strided_slice %106 {offsets = [0, 96], sizes = [2, 32], strides = [1, 1]} : vector<2x128xf32> to vector<2x32xf32>
    %115 = math.tanh %113 : vector<2x32xf32>
    %116 = arith.mulf %114, %115 : vector<2x32xf32>
    %117 = vector.extract_strided_slice %6 {offsets = [12, 0], sizes = [2, 128], strides = [1, 1]} : vector<14x128xf32> to vector<2x128xf32>
    %cst_21 = arith.constant dense<0.000000e+00> : vector<2x128xf32>
    %118 = tpu.matmul %116, %0, %cst_21 {dimension_numbers = #tpu.dot_dimension_numbers<[1], [0], [0], [1], [0, 0, 1, 1], [], []>} : vector<2x32xf32>, vector<32x128xf32>, vector<2x128xf32> -> vector<2x128xf32>
    %119 = arith.addf %117, %118 : vector<2x128xf32>
    %120 = arith.negf %119 : vector<2x128xf32>
    %121 = math.exp %120 : vector<2x128xf32>
    %cst_22 = arith.constant 1.000000e+00 : f32
    %122 = vector.broadcast %cst_22 : f32 to vector<2x128xf32>
    %123 = arith.addf %122, %121 : vector<2x128xf32>
    %124 = arith.divf %122, %123 : vector<2x128xf32>
    %125 = vector.extract_strided_slice %119 {offsets = [0, 64], sizes = [2, 32], strides = [1, 1]} : vector<2x128xf32> to vector<2x32xf32>
    %126 = math.tanh %125 : vector<2x32xf32>
    %127 = vector.extract_strided_slice %124 {offsets = [0, 32], sizes = [2, 32], strides = [1, 1]} : vector<2x128xf32> to vector<2x32xf32>
    %128 = arith.mulf %127, %113 : vector<2x32xf32>
    %129 = vector.extract_strided_slice %124 {offsets = [0, 0], sizes = [2, 32], strides = [1, 1]} : vector<2x128xf32> to vector<2x32xf32>
    %130 = arith.mulf %129, %126 : vector<2x32xf32>
    %131 = arith.addf %128, %130 : vector<2x32xf32>
    %132 = vector.extract_strided_slice %124 {offsets = [0, 96], sizes = [2, 32], strides = [1, 1]} : vector<2x128xf32> to vector<2x32xf32>
    %133 = math.tanh %131 : vector<2x32xf32>
    %134 = arith.mulf %132, %133 : vector<2x32xf32>
    %135 = tpu.concatenate %26, %44, %62, %80, %98, %116, %134 in 0 : vector<2x32xf32>, vector<2x32xf32>, vector<2x32xf32>, vector<2x32xf32>, vector<2x32xf32>, vector<2x32xf32>, vector<2x32xf32> -> vector<14x32xf32>
    %c0_23 = arith.constant 0 : index
    %c0_24 = arith.constant 0 : index
    %136 = vector.load %arg6[%c0_23, %c0_24] : memref<14x32xf32, #tpu.memory_space<vmem>>, vector<14x32xf32>
    tpu.vector_store %arg6[%c0_23, %c0_24], %135 {strides = array<i32>} : memref<14x32xf32, #tpu.memory_space<vmem>>, vector<14x32xf32>,
    %c0_25 = arith.constant 0 : index
    %c0_26 = arith.constant 0 : index
    %137 = vector.load %arg4[%c0_25, %c0_26] : memref<32x128xf32, #tpu.memory_space<vmem>>, vector<32x128xf32>
    %cst_27 = arith.constant dense<0.000000e+00> : vector<14x128xf32>
    %138 = tpu.matmul %135, %137, %cst_27 {dimension_numbers = #tpu.dot_dimension_numbers<[1], [0], [0], [1], [0, 0, 1, 1], [], []>} : vector<14x32xf32>, vector<32x128xf32>, vector<14x128xf32> -> vector<14x128xf32>
    %c0_28 = arith.constant 0 : index
    %c0_29 = arith.constant 0 : index
    %139 = vector.load %arg5[%c0_28, %c0_29] : memref<1x128xf32, #tpu.memory_space<vmem>>, vector<1x128xf32>
    %140 = vector.broadcast %139 : vector<1x128xf32> to vector<14x128xf32>
    %141 = arith.addf %138, %140 : vector<14x128xf32>
    %c0_30 = arith.constant 0 : index
    %c0_31 = arith.constant 0 : index
    %142 = vector.load %arg7[%c0_30, %c0_31] : memref<14x128xf32, #tpu.memory_space<vmem>>, vector<14x128xf32>
    tpu.vector_store %arg7[%c0_30, %c0_31], %141 {strides = array<i32>} : memref<14x128xf32, #tpu.memory_space<vmem>>, vector<14x128xf32>,
    return
  }
}

</mosaic_0001>

<llo_original>
// kernel: tpu_custom_call.1
$region0: #{tpu_custom_call.1}
  #allocation0 [shape = 'u32[]', space=smem, size = 0x4, offset = 0x4, fixed_abs, tag = 'smem constant byte address 0x4 - core index']
  #allocation1 [shape = 'u32[72,128]{1,0:T(1,128)}', space=vmem, size = 0x9000, scoped, tag = 'internal scratch']
  %s0 = inlined_call_operand.hbm [shape: f32[14,16], index: 0, kind: input, shape index: {}]
  %s1 = inlined_call_operand.hbm [shape: f32[16,128], index: 1, kind: input, shape index: {}]
  %s2 = inlined_call_operand.hbm [shape: f32[32,128], index: 2, kind: input, shape index: {}]
  %s3 = inlined_call_operand.vmem [shape: f32[1,128], index: 3, kind: input, shape index: {}]
  %s4 = inlined_call_operand.hbm [shape: f32[32,128], index: 4, kind: input, shape index: {}]
  %s5 = inlined_call_operand.vmem [shape: f32[1,128], index: 5, kind: input, shape index: {}]
  %s6 = inlined_call_operand.hbm [shape: f32[14,32], index: 6, kind: output, shape index: {0}]
  %s7 = inlined_call_operand.hbm [shape: f32[14,128], index: 7, kind: output, shape index: {1}]
  %8 = xla_tuple %s6, %s7
  %s9 = sld [smem:[#allocation0]]
  $region58: #{tpu_custom_call.1} parent=0
    _
  %s11 = ssub.s32 1, %s9
  %s12 = scalar_select 0, %s11, %s9
  $region1: #{tpu_custom_call.1} parent=0
    #allocation2 [shape = 'u8[8192]{0}', space=vmem, size = 0x2000, scoped, tag = 'input window, operand 0, single buffered']
    #allocation3 [shape = 's32[1]{0}', space=sflag, size = 0x4, scoped, tag = 'scoped memory for tpu_custom_call.1']
    #allocation4 [shape = 's32[1]{0}', space=sflag, size = 0x4, scoped, tag = 'scoped memory for tpu_custom_call.1']
    #allocation5 [shape = 'u8[8192]{0}', space=vmem, size = 0x2000, scoped, tag = 'input window, operand 1, single buffered']
    #allocation6 [shape = 's32[1]{0}', space=sflag, size = 0x4, scoped, tag = 'scoped memory for tpu_custom_call.1']
    #allocation7 [shape = 'u8[16384]{0}', space=vmem, size = 0x4000, scoped, tag = 'input window, operand 2, single buffered']
    #allocation8 [shape = 'u8[16384]{0}', space=vmem, size = 0x4000, scoped, tag = 'input window, operand 4, single buffered']
    #allocation9 [shape = 's32[1]{0}', space=sflag, size = 0x4, scoped, tag = 'scoped memory for tpu_custom_call.1']
    #allocation10 [shape = 'u8[8192]{0}', space=vmem, size = 0x2000, scoped, tag = 'output window, operand 0, single buffered']
    #allocation11 [shape = 'u8[8192]{0}', space=vmem, size = 0x2000, scoped, tag = 'output window, operand 1, single buffered']
    #allocation12 [shape = 's32[1]{0}', space=sflag, size = 0x4, scoped, tag = 'scoped memory for tpu_custom_call.1']
    %13 = vsyncpa [#allocation3], 0
    %14 = vsyncpa [#allocation6], 0
    %15 = vsyncpa [#allocation9], 0
    %16 = vsyncpa [#allocation4], 0
    %17 = vsyncpa [#allocation12], 0
    // Predicated region
    $region2: #{tpu_custom_call.1} parent=1 // pred_check
      _
    $region3: #{tpu_custom_call.1} parent=1 // pred_check_branch
      %19 = sbr.rel (0) target = $region5
    $region4: #{tpu_custom_call.1} parent=1 // pred_region
      %21 = vsyncadd [#allocation3], 0
      %s22 = sshll.u32 %s0, 4
      %s23 = int_to_ptr.hbm [resolvable:$true] %s22
      %s24 = sshll.u32 [#allocation2], 4
      %s25 = int_to_ptr.vmem [resolvable:$true] %s24
      %30 = dma.hbm_to_vmem [thread:$0]  %s23, 256, %s25, [#allocation3], 128, 128, 8
    $region5: #{tpu_custom_call.1} parent=1 // pred_fallthru
      _
    // Predicated region
    $region6: #{tpu_custom_call.1} parent=1 // pred_check
      _
    $region7: #{tpu_custom_call.1} parent=1 // pred_check_branch
      %32 = sbr.rel (0) target = $region9
    $region8: #{tpu_custom_call.1} parent=1 // pred_region
      %34 = vsyncadd [#allocation6], 0
      %s35 = sshll.u32 %s1, 4
      %s36 = int_to_ptr.hbm [resolvable:$true] %s35
      %s37 = sshll.u32 [#allocation5], 4
      %s38 = int_to_ptr.vmem [resolvable:$true] %s37
      %43 = dma.hbm_to_vmem [thread:$0]  %s36, 256, %s38, [#allocation6], 128, 128, 8
    $region9: #{tpu_custom_call.1} parent=1 // pred_fallthru
      _
    // Predicated region
    $region10: #{tpu_custom_call.1} parent=1 // pred_check
      _
    $region11: #{tpu_custom_call.1} parent=1 // pred_check_branch
      %45 = sbr.rel (0) target = $region13
    $region12: #{tpu_custom_call.1} parent=1 // pred_region
      %47 = vsyncadd [#allocation6], 0
      %s48 = sshll.u32 %s2, 4
      %s49 = int_to_ptr.hbm [resolvable:$true] %s48
      %s50 = sshll.u32 [#allocation7], 4
      %s51 = int_to_ptr.vmem [resolvable:$true] %s50
      %56 = dma.hbm_to_vmem [thread:$0]  %s49, 512, %s51, [#allocation6], 128, 128, 8
    $region13: #{tpu_custom_call.1} parent=1 // pred_fallthru
      _
    // Predicated region
    $region14: #{tpu_custom_call.1} parent=1 // pred_check
      _
    $region15: #{tpu_custom_call.1} parent=1 // pred_check_branch
      %58 = sbr.rel (0) target = $region17
    $region16: #{tpu_custom_call.1} parent=1 // pred_region
      _
    $region17: #{tpu_custom_call.1} parent=1 // pred_fallthru
      _
    // Predicated region
    $region18: #{tpu_custom_call.1} parent=1 // pred_check
      _
    $region19: #{tpu_custom_call.1} parent=1 // pred_check_branch
      %60 = sbr.rel (0) target = $region21
    $region20: #{tpu_custom_call.1} parent=1 // pred_region
      %62 = vsyncadd [#allocation9], 0
      %s63 = sshll.u32 %s4, 4
      %s64 = int_to_ptr.hbm [resolvable:$true] %s63
      %s65 = sshll.u32 [#allocation8], 4
      %s66 = int_to_ptr.vmem [resolvable:$true] %s65
      %71 = dma.hbm_to_vmem [thread:$0]  %s64, 512, %s66, [#allocation9], 128, 128, 8
    $region21: #{tpu_custom_call.1} parent=1 // pred_fallthru
      _
    // Predicated region
    $region22: #{tpu_custom_call.1} parent=1 // pred_check
      _
    $region23: #{tpu_custom_call.1} parent=1 // pred_check_branch
      %73 = sbr.rel (0) target = $region25
    $region24: #{tpu_custom_call.1} parent=1 // pred_region
      _
    $region25: #{tpu_custom_call.1} parent=1 // pred_fallthru
      _
    // Predicated region
    $region26: #{tpu_custom_call.1} parent=1 // pred_check
      _
    $region27: #{tpu_custom_call.1} parent=1 // pred_check_branch
      %75 = sbr.rel (0) target = $region29
    $region28: #{tpu_custom_call.1} parent=1 // pred_region
      %77 = dma.done [#allocation3], 256
    $region29: #{tpu_custom_call.1} parent=1 // pred_fallthru
      _
    // Predicated region
    $region30: #{tpu_custom_call.1} parent=1 // pred_check
      _
    $region31: #{tpu_custom_call.1} parent=1 // pred_check_branch
      %79 = sbr.rel (0) target = $region33
    $region32: #{tpu_custom_call.1} parent=1 // pred_region
      %81 = dma.done [#allocation6], 256
    $region33: #{tpu_custom_call.1} parent=1 // pred_fallthru
      _
    // Predicated region
    $region34: #{tpu_custom_call.1} parent=1 // pred_check
      _
    $region35: #{tpu_custom_call.1} parent=1 // pred_check_branch
      %83 = sbr.rel (0) target = $region37
    $region36: #{tpu_custom_call.1} parent=1 // pred_region
      %85 = dma.done [#allocation6], 512
    $region37: #{tpu_custom_call.1} parent=1 // pred_fallthru
      _
    // Predicated region
    $region38: #{tpu_custom_call.1} parent=1 // pred_check
      _
    $region39: #{tpu_custom_call.1} parent=1 // pred_check_branch
      %87 = sbr.rel (0) target = $region41
    $region40: #{tpu_custom_call.1} parent=1 // pred_region
      %89 = dma.done [#allocation9], 512
    $region41: #{tpu_custom_call.1} parent=1 // pred_fallthru
      _
    %v90 = vld [vmem:[#allocation7] sm:$0xff]
    %v91 = vld [vmem:[#allocation7 + $0x8] sm:$0xff]
    %v92 = vld [vmem:[#allocation7 + $0x10] sm:$0xff]
    %v93 = vld [vmem:[#allocation7 + $0x18] sm:$0xff]
    %v94 = vld [vmem:[#allocation2] sm:$0xff]
    %v95 = vld [vmem:[#allocation2 + $0x8] sm:$0x3f]
    %v96 = vld [vmem:[#allocation5] sm:$0xff]
    %v97 = vld [vmem:[#allocation5 + $0x8] sm:$0xff]
    %v98 = vld [vmem:[%s3] sm:$0x1]
    %v100 = vperm.slane %v98, 0
    %vm102 = vcmask 130048
    %v104 = vsel %vm102, %v94, 0
    %v107 = vsel %vm102, %v95, 0
    %109 = vmatpush.msra.mxu0 0.0
    %110 = vmatpush.msra.mxu0 0.0
    %111 = vmatpush.msra.mxu0 0.0
    %112 = vmatpush.msra.mxu0 0.0
    %113 = vmatpush.msra.mxu0 0.0
    %114 = vmatpush.msra.mxu0 0.0
    %115 = vmatpush.msra.mxu0 0.0
    %116 = vmatpush.msra.mxu0 0.0
    %117 = vmatpush.msra.mxu0 0.0
    %118 = vmatpush.msra.mxu0 0.0
    %119 = vmatpush.msra.mxu0 0.0
    %120 = vmatpush.msra.mxu0 0.0
    %121 = vmatpush.msra.mxu0 0.0
    %122 = vmatpush.msra.mxu0 0.0
    %123 = vmatpush.msra.mxu0 %v97
    %124 = vmatpush.msra.mxu0 %v96
    %125 = vmatmul.f32.gmra.mxu0 %v104
    %v126 = vpop.f32.mrf.mxu0
    %v127 = vadd.f32 %v100, %v126
    %128 = vmatmul.f32.gmra.mxu0 %v107
    %v129 = vpop.f32.mrf.mxu0
    %v130 = vadd.f32 %v100, %v129
    %131 = vdwg.mxu0
    %vm132 = vcmask 261120
    %v134 = vsel %vm132, 0.0, 0
    %136 = vmatpush.msra.mxu0 0.0
    %137 = vmatpush.msra.mxu0 0.0
    %138 = vmatpush.msra.mxu0 0.0
    %139 = vmatpush.msra.mxu0 0.0
    %140 = vmatpush.msra.mxu0 0.0
    %141 = vmatpush.msra.mxu0 0.0
    %142 = vmatpush.msra.mxu0 0.0
    %143 = vmatpush.msra.mxu0 0.0
    %144 = vmatpush.msra.mxu0 0.0
    %145 = vmatpush.msra.mxu0 0.0
    %146 = vmatpush.msra.mxu0 0.0
    %147 = vmatpush.msra.mxu0 0.0
    %148 = vmatpush.msra.mxu0 %v93
    %149 = vmatpush.msra.mxu0 %v92
    %150 = vmatpush.msra.mxu0 %v91
    %151 = vmatpush.msra.mxu0 %v90
    %152 = vmatmul.f32.gmra.mxu0 %v134
    %v153 = vpop.f32.mrf.mxu0
    %v154 = vadd.f32 0.0, %v153
    %155 = vdwg.mxu0
    %v156 = vadd.f32 %v127, %v154
    %v157 = vxor.u32 %v156, 2147483648
    %v158 = vmul.f32 %v157, 1.442695
    %v159 = vpow.pop %v158
    %v160 = vadd.f32 %v159, 1.0
    %v161 = vrcp.pop %v160
    %v162 = vmul.f32 %v160, %v161
    %v163 = vsub.f32 1.0, %v162
    %v164 = vmul.f32 %v161, %v163
    %v165 = vadd.f32 %v161, %v164
    %vm166 = vweird.f32 %v160
    %vm167 = vweird.f32 %v161
    %vm168 = vmor %vm166, %vm167
    %v169 = vsel %vm168, %v161, %v165
    %v170 = vand.u32 2147483647, %v160
    %vm171 = vcmp.eq.f32.partialorder %v170, 8.507059e+37
    %v172 = vand.u32 %v160, 2147483648
    %v173 = vor.u32 1.1754944e-38, %v172
    %v174 = vsel %vm171, %v173, %v169
    %v175 = vmul.f32 1.0, %v174
    %v176 = vtanh.pop %v156
    %v177 = vmul.f32 %v175, 0.0
    %179 = vrot.lane.b32.xlu0 %v176, 64
    %v180 = vpop.permute.xlu0 %179
    %v182 = vmul.f32 %v175, %v180
    %184 = vrot.lane.b32.xlu0 %v182, 32
    %v185 = vpop.permute.xlu0 %184
    %v187 = vadd.f32 %v177, %v185
    %v188 = vtanh.pop %v187
    %190 = vrot.lane.b32.xlu0 %v188, 64
    %v191 = vpop.permute.xlu0 %190
    %v193 = vmul.f32 %v175, %v191
    %195 = vrot.lane.b32.xlu0 %v193, 32
    %v196 = vpop.permute.xlu0 %195
    %v197 = vsel %vm132, %v196, 0
    %199 = vmatpush.msra.mxu0 0.0
    %200 = vmatpush.msra.mxu0 0.0
    %201 = vmatpush.msra.mxu0 0.0
    %202 = vmatpush.msra.mxu0 0.0
    %203 = vmatpush.msra.mxu0 0.0
    %204 = vmatpush.msra.mxu0 0.0
    %205 = vmatpush.msra.mxu0 0.0
    %206 = vmatpush.msra.mxu0 0.0
    %207 = vmatpush.msra.mxu0 0.0
    %208 = vmatpush.msra.mxu0 0.0
    %209 = vmatpush.msra.mxu0 0.0
    %210 = vmatpush.msra.mxu0 0.0
    %211 = vmatpush.msra.mxu0 %v93
    %212 = vmatpush.msra.mxu0 %v92
    %213 = vmatpush.msra.mxu0 %v91
    %214 = vmatpush.msra.mxu0 %v90
    %215 = vmatmul.f32.gmra.mxu0 %v197
    %v216 = vpop.f32.mrf.mxu0
    %v217 = vadd.f32 0.0, %v216
    %218 = vdwg.mxu0
    %v220 = vrot.slane %v217, 6
    %v222 = vadd.f32 %v127, %v220
    %v223 = vxor.u32 %v222, 2147483648
    %v224 = vmul.f32 %v223, 1.442695
    %v225 = vpow.pop %v224
    %v226 = vadd.f32 %v225, 1.0
    %v227 = vrcp.pop %v226
    %v228 = vmul.f32 %v226, %v227
    %v229 = vsub.f32 1.0, %v228
    %v230 = vmul.f32 %v227, %v229
    %v231 = vadd.f32 %v227, %v230
    %vm232 = vweird.f32 %v226
    %vm233 = vweird.f32 %v227
    %vm234 = vmor %vm232, %vm233
    %v235 = vsel %vm234, %v227, %v231
    %v236 = vand.u32 2147483647, %v226
    %vm237 = vcmp.eq.f32.partialorder %v236, 8.507059e+37
    %v238 = vand.u32 %v226, 2147483648
    %v239 = vor.u32 1.1754944e-38, %v238
    %v240 = vsel %vm237, %v239, %v235
    %v241 = vmul.f32 1.0, %v240
    %v242 = vtanh.pop %v222
    %v244 = vrot.slane %v187, 6
    %v246 = vmul.f32 %v241, %v244
    %248 = vrot.lane.b32.xlu0 %v242, 64
    %v249 = vpop.permute.xlu0 %248
    %v251 = vmul.f32 %v241, %v249
    %253 = vrot.lane.b32.xlu0 %v251, 32
    %v254 = vpop.permute.xlu0 %253
    %v256 = vadd.f32 %v246, %v254
    %v257 = vtanh.pop %v256
    %259 = vrot.lane.b32.xlu0 %v257, 64
    %v260 = vpop.permute.xlu0 %259
    %v262 = vmul.f32 %v241, %v260
    %v264 = vrot.slane %v262, 2
    %265 = vrot.lane.b32.xlu0 %v264, 32
    %v266 = vpop.permute.xlu0 %265
    %v267 = vsel %vm132, %v266, 0
    %269 = vmatpush.msra.mxu0 0.0
    %270 = vmatpush.msra.mxu0 0.0
    %271 = vmatpush.msra.mxu0 0.0
    %272 = vmatpush.msra.mxu0 0.0
    %273 = vmatpush.msra.mxu0 0.0
    %274 = vmatpush.msra.mxu0 0.0
    %275 = vmatpush.msra.mxu0 0.0
    %276 = vmatpush.msra.mxu0 0.0
    %277 = vmatpush.msra.mxu0 0.0
    %278 = vmatpush.msra.mxu0 0.0
    %279 = vmatpush.msra.mxu0 0.0
    %280 = vmatpush.msra.mxu0 0.0
    %281 = vmatpush.msra.mxu0 %v93
    %282 = vmatpush.msra.mxu0 %v92
    %283 = vmatpush.msra.mxu0 %v91
    %284 = vmatpush.msra.mxu0 %v90
    %285 = vmatmul.f32.gmra.mxu0 %v267
    %v286 = vpop.f32.mrf.mxu0
    %v287 = vadd.f32 0.0, %v286
    %288 = vdwg.mxu0
    %v290 = vrot.slane %v287, 4
    %v292 = vadd.f32 %v127, %v290
    %v293 = vxor.u32 %v292, 2147483648
    %v294 = vmul.f32 %v293, 1.442695
    %v295 = vpow.pop %v294
    %v296 = vadd.f32 %v295, 1.0
    %v297 = vrcp.pop %v296
    %v298 = vmul.f32 %v296, %v297
    %v299 = vsub.f32 1.0, %v298
    %v300 = vmul.f32 %v297, %v299
    %v301 = vadd.f32 %v297, %v300
    %vm302 = vweird.f32 %v296
    %vm303 = vweird.f32 %v297
    %vm304 = vmor %vm302, %vm303
    %v305 = vsel %vm304, %v297, %v301
    %v306 = vand.u32 2147483647, %v296
    %vm307 = vcmp.eq.f32.partialorder %v306, 8.507059e+37
    %v308 = vand.u32 %v296, 2147483648
    %v309 = vor.u32 1.1754944e-38, %v308
    %v310 = vsel %vm307, %v309, %v305
    %v311 = vmul.f32 1.0, %v310
    %v312 = vtanh.pop %v292
    %v314 = vrot.slane %v256, 6
    %v316 = vmul.f32 %v311, %v314
    %318 = vrot.lane.b32.xlu0 %v312, 64
    %v319 = vpop.permute.xlu0 %318
    %v321 = vmul.f32 %v311, %v319
    %323 = vrot.lane.b32.xlu0 %v321, 32
    %v324 = vpop.permute.xlu0 %323
    %v326 = vadd.f32 %v316, %v324
    %v327 = vtanh.pop %v326
    %329 = vrot.lane.b32.xlu0 %v327, 64
    %v330 = vpop.permute.xlu0 %329
    %v332 = vmul.f32 %v311, %v330
    %v334 = vrot.slane %v332, 4
    %335 = vrot.lane.b32.xlu0 %v334, 32
    %v336 = vpop.permute.xlu0 %335
    %v337 = vsel %vm132, %v336, 0
    %339 = vmatpush.msra.mxu0 0.0
    %340 = vmatpush.msra.mxu0 0.0
    %341 = vmatpush.msra.mxu0 0.0
    %342 = vmatpush.msra.mxu0 0.0
    %343 = vmatpush.msra.mxu0 0.0
    %344 = vmatpush.msra.mxu0 0.0
    %345 = vmatpush.msra.mxu0 0.0
    %346 = vmatpush.msra.mxu0 0.0
    %347 = vmatpush.msra.mxu0 0.0
    %348 = vmatpush.msra.mxu0 0.0
    %349 = vmatpush.msra.mxu0 0.0
    %350 = vmatpush.msra.mxu0 0.0
    %351 = vmatpush.msra.mxu0 %v93
    %352 = vmatpush.msra.mxu0 %v92
    %353 = vmatpush.msra.mxu0 %v91
    %354 = vmatpush.msra.mxu0 %v90
    %355 = vmatmul.f32.gmra.mxu0 %v337
    %v356 = vpop.f32.mrf.mxu0
    %v357 = vadd.f32 0.0, %v356
    %358 = vdwg.mxu0
    %v360 = vrot.slane %v357, 2
    %v362 = vadd.f32 %v127, %v360
    %v363 = vxor.u32 %v362, 2147483648
    %v364 = vmul.f32 %v363, 1.442695
    %v365 = vpow.pop %v364
    %v366 = vadd.f32 %v365, 1.0
    %v367 = vrcp.pop %v366
    %v368 = vmul.f32 %v366, %v367
    %v369 = vsub.f32 1.0, %v368
    %v370 = vmul.f32 %v367, %v369
    %v371 = vadd.f32 %v367, %v370
    %vm372 = vweird.f32 %v366
    %vm373 = vweird.f32 %v367
    %vm374 = vmor %vm372, %vm373
    %v375 = vsel %vm374, %v367, %v371
    %v376 = vand.u32 2147483647, %v366
    %vm377 = vcmp.eq.f32.partialorder %v376, 8.507059e+37
    %v378 = vand.u32 %v366, 2147483648
    %v379 = vor.u32 1.1754944e-38, %v378
    %v380 = vsel %vm377, %v379, %v375
    %v381 = vmul.f32 1.0, %v380
    %v382 = vtanh.pop %v362
    %v384 = vrot.slane %v326, 6
    %v386 = vmul.f32 %v381, %v384
    %388 = vrot.lane.b32.xlu0 %v382, 64
    %v389 = vpop.permute.xlu0 %388
    %v391 = vmul.f32 %v381, %v389
    %393 = vrot.lane.b32.xlu0 %v391, 32
    %v394 = vpop.permute.xlu0 %393
    %v396 = vadd.f32 %v386, %v394
    %v397 = vtanh.pop %v396
    %399 = vrot.lane.b32.xlu0 %v397, 64
    %v400 = vpop.permute.xlu0 %399
    %v402 = vmul.f32 %v381, %v400
    %v404 = vrot.slane %v402, 6
    %405 = vrot.lane.b32.xlu0 %v404, 32
    %v406 = vpop.permute.xlu0 %405
    %v407 = vsel %vm132, %v406, 0
    %409 = vmatpush.msra.mxu0 0.0
    %410 = vmatpush.msra.mxu0 0.0
    %411 = vmatpush.msra.mxu0 0.0
    %412 = vmatpush.msra.mxu0 0.0
    %413 = vmatpush.msra.mxu0 0.0
    %414 = vmatpush.msra.mxu0 0.0
    %415 = vmatpush.msra.mxu0 0.0
    %416 = vmatpush.msra.mxu0 0.0
    %417 = vmatpush.msra.mxu0 0.0
    %418 = vmatpush.msra.mxu0 0.0
    %419 = vmatpush.msra.mxu0 0.0
    %420 = vmatpush.msra.mxu0 0.0
    %421 = vmatpush.msra.mxu0 %v93
    %422 = vmatpush.msra.mxu0 %v92
    %423 = vmatpush.msra.mxu0 %v91
    %424 = vmatpush.msra.mxu0 %v90
    %425 = vmatmul.f32.gmra.mxu0 %v407
    %v426 = vpop.f32.mrf.mxu0
    %v427 = vadd.f32 0.0, %v426
    %428 = vdwg.mxu0
    %v429 = vadd.f32 %v130, %v427
    %v430 = vxor.u32 %v429, 2147483648
    %v431 = vmul.f32 %v430, 1.442695
    %v432 = vpow.pop %v431
    %v433 = vadd.f32 %v432, 1.0
    %v434 = vrcp.pop %v433
    %v435 = vmul.f32 %v433, %v434
    %v436 = vsub.f32 1.0, %v435
    %v437 = vmul.f32 %v434, %v436
    %v438 = vadd.f32 %v434, %v437
    %vm439 = vweird.f32 %v433
    %vm440 = vweird.f32 %v434
    %vm441 = vmor %vm439, %vm440
    %v442 = vsel %vm441, %v434, %v438
    %v443 = vand.u32 2147483647, %v433
    %vm444 = vcmp.eq.f32.partialorder %v443, 8.507059e+37
    %v445 = vand.u32 %v433, 2147483648
    %v446 = vor.u32 1.1754944e-38, %v445
    %v447 = vsel %vm444, %v446, %v442
    %v448 = vmul.f32 1.0, %v447
    %v449 = vtanh.pop %v429
    %v451 = vrot.slane %v396, 6
    %v453 = vmul.f32 %v448, %v451
    %455 = vrot.lane.b32.xlu0 %v449, 64
    %v456 = vpop.permute.xlu0 %455
    %v458 = vmul.f32 %v448, %v456
    %460 = vrot.lane.b32.xlu0 %v458, 32
    %v461 = vpop.permute.xlu0 %460
    %v463 = vadd.f32 %v453, %v461
    %v464 = vtanh.pop %v463
    %466 = vrot.lane.b32.xlu0 %v464, 64
    %v467 = vpop.permute.xlu0 %466
    %v469 = vmul.f32 %v448, %v467
    %471 = vrot.lane.b32.xlu0 %v469, 32
    %v472 = vpop.permute.xlu0 %471
    %v473 = vsel %vm132, %v472, 0
    %475 = vmatpush.msra.mxu0 0.0
    %476 = vmatpush.msra.mxu0 0.0
    %477 = vmatpush.msra.mxu0 0.0
    %478 = vmatpush.msra.mxu0 0.0
    %479 = vmatpush.msra.mxu0 0.0
    %480 = vmatpush.msra.mxu0 0.0
    %481 = vmatpush.msra.mxu0 0.0
    %482 = vmatpush.msra.mxu0 0.0
    %483 = vmatpush.msra.mxu0 0.0
    %484 = vmatpush.msra.mxu0 0.0
    %485 = vmatpush.msra.mxu0 0.0
    %486 = vmatpush.msra.mxu0 0.0
    %487 = vmatpush.msra.mxu0 %v93
    %488 = vmatpush.msra.mxu0 %v92
    %489 = vmatpush.msra.mxu0 %v91
    %490 = vmatpush.msra.mxu0 %v90
    %491 = vmatmul.f32.gmra.mxu0 %v473
    %v492 = vpop.f32.mrf.mxu0
    %v493 = vadd.f32 0.0, %v492
    %494 = vdwg.mxu0
    %v496 = vrot.slane %v493, 6
    %v498 = vadd.f32 %v130, %v496
    %v499 = vxor.u32 %v498, 2147483648
    %v500 = vmul.f32 %v499, 1.442695
    %v501 = vpow.pop %v500
    %v502 = vadd.f32 %v501, 1.0
    %v503 = vrcp.pop %v502
    %v504 = vmul.f32 %v502, %v503
    %v505 = vsub.f32 1.0, %v504
    %v506 = vmul.f32 %v503, %v505
    %v507 = vadd.f32 %v503, %v506
    %vm508 = vweird.f32 %v502
    %vm509 = vweird.f32 %v503
    %vm510 = vmor %vm508, %vm509
    %v511 = vsel %vm510, %v503, %v507
    %v512 = vand.u32 2147483647, %v502
    %vm513 = vcmp.eq.f32.partialorder %v512, 8.507059e+37
    %v514 = vand.u32 %v502, 2147483648
    %v515 = vor.u32 1.1754944e-38, %v514
    %v516 = vsel %vm513, %v515, %v511
    %v517 = vmul.f32 1.0, %v516
    %v518 = vtanh.pop %v498
    %v520 = vrot.slane %v463, 6
    %v522 = vmul.f32 %v517, %v520
    %524 = vrot.lane.b32.xlu0 %v518, 64
    %v525 = vpop.permute.xlu0 %524
    %v527 = vmul.f32 %v517, %v525
    %529 = vrot.lane.b32.xlu0 %v527, 32
    %v530 = vpop.permute.xlu0 %529
    %v532 = vadd.f32 %v522, %v530
    %v533 = vtanh.pop %v532
    %535 = vrot.lane.b32.xlu0 %v533, 64
    %v536 = vpop.permute.xlu0 %535
    %v538 = vmul.f32 %v517, %v536
    %v540 = vrot.slane %v538, 2
    %541 = vrot.lane.b32.xlu0 %v540, 32
    %v542 = vpop.permute.xlu0 %541
    %v543 = vsel %vm132, %v542, 0
    %545 = vmatpush.msra.mxu0 0.0
    %546 = vmatpush.msra.mxu0 0.0
    %547 = vmatpush.msra.mxu0 0.0
    %548 = vmatpush.msra.mxu0 0.0
    %549 = vmatpush.msra.mxu0 0.0
    %550 = vmatpush.msra.mxu0 0.0
    %551 = vmatpush.msra.mxu0 0.0
    %552 = vmatpush.msra.mxu0 0.0
    %553 = vmatpush.msra.mxu0 0.0
    %554 = vmatpush.msra.mxu0 0.0
    %555 = vmatpush.msra.mxu0 0.0
    %556 = vmatpush.msra.mxu0 0.0
    %557 = vmatpush.msra.mxu0 %v93
    %558 = vmatpush.msra.mxu0 %v92
    %559 = vmatpush.msra.mxu0 %v91
    %560 = vmatpush.msra.mxu0 %v90
    %561 = vmatmul.f32.gmra.mxu0 %v543
    %v562 = vpop.f32.mrf.mxu0
    %v563 = vadd.f32 0.0, %v562
    %564 = vdwg.mxu0
    %v566 = vrot.slane %v563, 4
    %v568 = vadd.f32 %v130, %v566
    %v569 = vxor.u32 %v568, 2147483648
    %v570 = vmul.f32 %v569, 1.442695
    %v571 = vpow.pop %v570
    %v572 = vadd.f32 %v571, 1.0
    %v573 = vrcp.pop %v572
    %v574 = vmul.f32 %v572, %v573
    %v575 = vsub.f32 1.0, %v574
    %v576 = vmul.f32 %v573, %v575
    %v577 = vadd.f32 %v573, %v576
    %vm578 = vweird.f32 %v572
    %vm579 = vweird.f32 %v573
    %vm580 = vmor %vm578, %vm579
    %v581 = vsel %vm580, %v573, %v577
    %v582 = vand.u32 2147483647, %v572
    %vm583 = vcmp.eq.f32.partialorder %v582, 8.507059e+37
    %v584 = vand.u32 %v572, 2147483648
    %v585 = vor.u32 1.1754944e-38, %v584
    %v586 = vsel %vm583, %v585, %v581
    %v587 = vmul.f32 1.0, %v586
    %v588 = vtanh.pop %v568
    %v590 = vrot.slane %v532, 6
    %v592 = vmul.f32 %v587, %v590
    %594 = vrot.lane.b32.xlu0 %v588, 64
    %v595 = vpop.permute.xlu0 %594
    %v597 = vmul.f32 %v587, %v595
    %599 = vrot.lane.b32.xlu0 %v597, 32
    %v600 = vpop.permute.xlu0 %599
    %v602 = vadd.f32 %v592, %v600
    %v603 = vtanh.pop %v602
    %605 = vrot.lane.b32.xlu0 %v603, 64
    %v606 = vpop.permute.xlu0 %605
    %v608 = vmul.f32 %v587, %v606
    %vm609 = vcmask 1041408
    %v610 = vsel %vm609, %v193, %v262
    %vm611 = vcmask 1043456
    %v612 = vsel %vm611, %v610, %v332
    %vm613 = vcmask 1045504
    %v614 = vsel %vm613, %v612, %v402
    %v615 = vsel %vm609, %v469, %v538
    %v616 = vsel %vm611, %v615, %v608
    %619 = vrot.lane.b32.xlu0 %v614, 32
    %v620 = vpop.permute.xlu0 %619
    %621 = vrot.lane.b32.xlu0 %v616, 32
    %v622 = vpop.permute.xlu0 %621
    %625 = vst.msk [vmem:[#allocation10] sm:$0xff] %vm132, %v620
    %vm626 = vcmask 259072
    %627 = vst.msk [vmem:[#allocation10 + $0x8] sm:$0x3f] %vm626, %v622
    %v628 = vld [vmem:[#allocation8] sm:$0xff]
    %v629 = vld [vmem:[#allocation8 + $0x8] sm:$0xff]
    %v630 = vld [vmem:[#allocation8 + $0x10] sm:$0xff]
    %v631 = vld [vmem:[#allocation8 + $0x18] sm:$0xff]
    %v632 = vld [vmem:[%s5] sm:$0x1]
    %v634 = vperm.slane %v632, 0
    %v636 = vsel %vm132, %v620, 0
    %v638 = vsel %vm132, %v622, 0
    %640 = vmatpush.msra.mxu0 0.0
    %641 = vmatpush.msra.mxu0 0.0
    %642 = vmatpush.msra.mxu0 0.0
    %643 = vmatpush.msra.mxu0 0.0
    %644 = vmatpush.msra.mxu0 0.0
    %645 = vmatpush.msra.mxu0 0.0
    %646 = vmatpush.msra.mxu0 0.0
    %647 = vmatpush.msra.mxu0 0.0
    %648 = vmatpush.msra.mxu0 0.0
    %649 = vmatpush.msra.mxu0 0.0
    %650 = vmatpush.msra.mxu0 0.0
    %651 = vmatpush.msra.mxu0 0.0
    %652 = vmatpush.msra.mxu0 %v631
    %653 = vmatpush.msra.mxu0 %v630
    %654 = vmatpush.msra.mxu0 %v629
    %655 = vmatpush.msra.mxu0 %v628
    %656 = vmatmul.f32.gmra.mxu0 %v636
    %v657 = vpop.f32.mrf.mxu0
    %v658 = vadd.f32 %v634, %v657
    %659 = vmatmul.f32.gmra.mxu0 %v638
    %v660 = vpop.f32.mrf.mxu0
    %v661 = vadd.f32 %v634, %v660
    %662 = vdwg.mxu0
    %663 = vst [vmem:[#allocation11] sm:$0xff] %v658
    %664 = vst [vmem:[#allocation11 + $0x8] sm:$0x3f] %v661
    // Predicated region
    $region42: #{tpu_custom_call.1} parent=1 // pred_check
      _
    $region43: #{tpu_custom_call.1} parent=1 // pred_check_branch
      %666 = sbr.rel (0) target = $region45
    $region44: #{tpu_custom_call.1} parent=1 // pred_region
      %668 = vsyncadd [#allocation4], 0
      %s669 = sshll.u32 [#allocation10], 4
      %s670 = int_to_ptr.vmem [resolvable:$true] %s669
      %s671 = sshll.u32 %s6, 4
      %s672 = int_to_ptr.hbm [resolvable:$true] %s671
      %677 = dma.vmem_to_hbm [thread:$0]  %s670, 256, %s672, [#allocation4], 128, 128, 8
    $region45: #{tpu_custom_call.1} parent=1 // pred_fallthru
      _
    // Predicated region
    $region46: #{tpu_custom_call.1} parent=1 // pred_check
      _
    $region47: #{tpu_custom_call.1} parent=1 // pred_check_branch
      %679 = sbr.rel (0) target = $region49
    $region48: #{tpu_custom_call.1} parent=1 // pred_region
      %681 = vsyncadd [#allocation12], 0
      %s682 = sshll.u32 [#allocation11], 4
      %s683 = int_to_ptr.vmem [resolvable:$true] %s682
      %s684 = sshll.u32 %s7, 4
      %s685 = int_to_ptr.hbm [resolvable:$true] %s684
      %690 = dma.vmem_to_hbm [thread:$0]  %s683, 256, %s685, [#allocation12], 128, 128, 8
    $region49: #{tpu_custom_call.1} parent=1 // pred_fallthru
      _
    // Predicated region
    $region50: #{tpu_custom_call.1} parent=1 // pred_check
      _
    $region51: #{tpu_custom_call.1} parent=1 // pred_check_branch
      %692 = sbr.rel (0) target = $region53
    $region52: #{tpu_custom_call.1} parent=1 // pred_region
      %694 = dma.done [#allocation4], 256
    $region53: #{tpu_custom_call.1} parent=1 // pred_fallthru
      _
    // Predicated region
    $region54: #{tpu_custom_call.1} parent=1 // pred_check
      _
    $region55: #{tpu_custom_call.1} parent=1 // pred_check_branch
      %696 = sbr.rel (0) target = $region57
    $region56: #{tpu_custom_call.1} parent=1 // pred_region
      %698 = dma.done [#allocation12], 256
    $region57: #{tpu_custom_call.1} parent=1 // pred_fallthru
      _
    %699 = vsyncpa [#allocation3], 1
    %700 = vsyncpa [#allocation6], 1
    %701 = vsyncpa [#allocation9], 1
    %702 = vsyncpa [#allocation4], 1
    %703 = vsyncpa [#allocation12], 1

</llo_original>
